<compile_context>
chip_gen: v7x
topology: tpu7x:2x2x1
jax: 0.10.0
libtpu: 0.0.40
codegen_flags: <defaults>
</compile_context>

<pallas_src>
import jax
import jax.numpy as jnp
from jax import lax
from jax.experimental import pallas as pl
from jax.experimental.pallas import tpu as pltpu


def _round_up(a: int, m: int) -> int:
    return ((a + m - 1) // m) * m


# Contract x:(M, K) with w:(N, K) over K (PyTorch nn.Linear weight layout),
# i.e. x @ w.T, without materializing w.T anywhere.
_CONTRACT_K = (((1,), (1,)), ((), ()))

# f32 tile caps (multiples of the (8, 128) vreg tile). 256/512 widths use the
# full 2x256^2 MXU on v6e/v7x; still 128-multiples so v5e's 4x128^2 MXU is
# native. Footprint 2*(tm*tk + tn*tk + tm*tn)*4 + tm*tn*4 ~= 4.5 MiB.
_TM_CAP, _TN_CAP, _TK_CAP = 256, 512, 512


def _small_linear_kernel(x_ref, w_ref, b_ref, o_ref):
    """Single-block path: full (unpadded) arrays resident in VMEM."""
    acc = lax.dot_general(
        x_ref[...], w_ref[...], _CONTRACT_K, preferred_element_type=jnp.float32
    )
    o_ref[...] = (acc + b_ref[...].astype(jnp.float32)).astype(o_ref.dtype)


def _tiled_linear_kernel(x_ref, w_ref, b_ref, o_ref, acc_ref):
    """One (tm, tn) output tile; K reduced over trailing grid axis 2."""
    k = pl.program_id(2)
    partial = lax.dot_general(
        x_ref[...], w_ref[...], _CONTRACT_K, preferred_element_type=jnp.float32
    )

    @pl.when(k == 0)
    def _init():
        # Write, don't zero-then-add: saves a (tm, tn) VMEM store per tile.
        acc_ref[...] = partial

    @pl.when(k != 0)
    def _accumulate():
        acc_ref[...] += partial

    @pl.when(k == pl.num_programs(2) - 1)
    def _finalize():
        # Fused bias epilogue: broadcast (1, tn) bias over the (tm, tn) tile.
        o_ref[...] = (acc_ref[...] + b_ref[...].astype(jnp.float32)).astype(
            o_ref.dtype
        )


@jax.jit
def linear_forward(x, w, b):
    """Pallas nn.Linear forward: x @ w.T + b.

    x: (M, K) activations, w: (N, K) weight (PyTorch layout), b: (N,) bias.
    """
    M, K = x.shape
    N, K2 = w.shape
    assert K == K2 and b.shape == (N,)

    b2 = b.reshape(1, N)  # metadata-only reshape; broadcast row in the kernel

    itemsize = jnp.dtype(x.dtype).itemsize
    cost = pl.CostEstimate(
        flops=2 * M * N * K,
        bytes_accessed=(M * K + N * K + N + M * N) * itemsize,
        transcendentals=0,
    )

    # ---- Tiny / single-block path (covers the (2,10)@(10,5) spec shape) ----
    # block_shape == full array dims is allowed regardless of (8,128), so no
    # HBM pad/slice copies are generated at all.
    if M <= _TM_CAP and N <= _TN_CAP and K <= _TK_CAP:
        return pl.pallas_call(
            _small_linear_kernel,
            out_shape=jax.ShapeDtypeStruct((M, N), x.dtype),
            cost_estimate=cost,
        )(x, w, b2)

    # ---- Tiled path for larger shapes ----
    # TODO(synk): tile caps are f32-specific; make sublane rounding dtype-aware
    # (16 for bf16, 32 for int8/fp8) if lower-precision inputs are ever fed.
    tm = min(_TM_CAP, _round_up(M, 8))
    tn = min(_TN_CAP, _round_up(N, 128))
    tk = min(_TK_CAP, _round_up(K, 128))

    Mp, Np, Kp = _round_up(M, tm), _round_up(N, tn), _round_up(K, tk)

    # Pad only when needed. K padding must be explicit zeros (never implicit
    # block padding) so the reduction stays exact.
    xp = x if (Mp == M and Kp == K) else (
        jnp.zeros((Mp, Kp), x.dtype).at[:M, :K].set(x)
    )
    wp = w if (Np == N and Kp == K) else (
        jnp.zeros((Np, Kp), w.dtype).at[:N, :K].set(w)
    )
    bp = b2 if Np == N else jnp.zeros((1, Np), b.dtype).at[:, :N].set(b2)

    grid = (Mp // tm, Np // tn, Kp // tk)

    out = pl.pallas_call(
        _tiled_linear_kernel,
        out_shape=jax.ShapeDtypeStruct((Mp, Np), x.dtype),
        grid_spec=pltpu.PrefetchScalarGridSpec(
            num_scalar_prefetch=0,
            grid=grid,
            in_specs=[
                pl.BlockSpec((tm, tk), lambda i, j, k: (i, k)),  # x tile
                pl.BlockSpec((tn, tk), lambda i, j, k: (j, k)),  # w tile (N,K)
                pl.BlockSpec((1, tn), lambda i, j, k: (0, j)),   # bias tile
            ],
            out_specs=pl.BlockSpec((tm, tn), lambda i, j, k: (i, j)),
            scratch_shapes=[pltpu.VMEM((tm, tn), jnp.float32)],
        ),
        compiler_params=pltpu.CompilerParams(
            # On v7x the two parallel axes shard across both TensorCores once
            # M/tm or N/tn >= 2; K stays the trailing "arbitrary" reduction.
            dimension_semantics=("parallel", "parallel", "arbitrary"),
        ),
        cost_estimate=cost,
    )(xp, wp, bp)

    if Mp == M and Np == N:
        return out
    return out[:M, :N]


if __name__ == "__main__":
    key = jax.random.PRNGKey(0)
    kx, kw, kb = jax.random.split(key, 3)

    # Shapes from LinearModule: nn.Linear(10, 5), x of shape (2, 10).
    x = jax.random.normal(kx, (2, 10), dtype=jnp.float32)
    w = jax.random.normal(kw, (5, 10), dtype=jnp.float32) * 0.1  # (out, in)
    b = jax.random.normal(kb, (5,), dtype=jnp.float32) * 0.1     # (out,)

    out = linear_forward(x, w, b)
    jax.block_until_ready(out)

    ref = x @ w.T + b
    assert out.shape == ref.shape and out.dtype == ref.dtype
    assert jnp.allclose(out, ref, atol=1e-5, rtol=1e-5), "small-path mismatch"

    # Also exercise the tiled multi-K-step path at an aligned larger shape.
    kx2, kw2, kb2 = jax.random.split(jax.random.PRNGKey(1), 3)
    x2 = jax.random.normal(kx2, (256, 1024), dtype=jnp.float32)
    w2 = jax.random.normal(kw2, (512, 1024), dtype=jnp.float32) * 0.03
    b2 = jax.random.normal(kb2, (512,), dtype=jnp.float32) * 0.1

    out2 = linear_forward(x2, w2, b2)
    jax.block_until_ready(out2)
    ref2 = jnp.dot(x2, w2.T, precision=lax.Precision.HIGHEST) + b2
    assert out2.shape == ref2.shape
    assert jnp.allclose(out2, ref2, atol=2e-2, rtol=2e-2), "tiled-path mismatch"

    print("KERNEL_OK")
</pallas_src>

<mosaic_0001>
module attributes {stable_mosaic.version = 11 : i64} {
  func.func @_small_linear_kernel(%arg0: memref<2x10xf32, #tpu.memory_space<vmem>>, %arg1: memref<5x10xf32, #tpu.memory_space<vmem>>, %arg2: memref<1x5xf32, #tpu.memory_space<vmem>>, %arg3: memref<2x5xf32, #tpu.memory_space<vmem>>) attributes {dimension_semantics = [], scalar_prefetch = 0 : i64, scratch_operands = 0 : i64, tpu.core_type = #tpu.core_type<tc>} {
    %c0 = arith.constant 0 : index
    %c0_0 = arith.constant 0 : index
    %0 = vector.load %arg0[%c0, %c0_0] : memref<2x10xf32, #tpu.memory_space<vmem>>, vector<2x10xf32>
    %c0_1 = arith.constant 0 : index
    %c0_2 = arith.constant 0 : index
    %1 = vector.load %arg1[%c0_1, %c0_2] : memref<5x10xf32, #tpu.memory_space<vmem>>, vector<5x10xf32>
    %cst = arith.constant dense<0.000000e+00> : vector<2x5xf32>
    %2 = tpu.matmul %0, %1, %cst {dimension_numbers = #tpu.dot_dimension_numbers<[1], [1], [0], [0], [0, 0, 1, 0], [], []>} : vector<2x10xf32>, vector<5x10xf32>, vector<2x5xf32> -> vector<2x5xf32>
    %c0_3 = arith.constant 0 : index
    %c0_4 = arith.constant 0 : index
    %3 = vector.load %arg2[%c0_3, %c0_4] : memref<1x5xf32, #tpu.memory_space<vmem>>, vector<1x5xf32>
    %4 = vector.broadcast %3 : vector<1x5xf32> to vector<2x5xf32>
    %5 = arith.addf %2, %4 : vector<2x5xf32>
    %c0_5 = arith.constant 0 : index
    %c0_6 = arith.constant 0 : index
    %6 = vector.load %arg3[%c0_5, %c0_6] : memref<2x5xf32, #tpu.memory_space<vmem>>, vector<2x5xf32>
    tpu.vector_store %arg3[%c0_5, %c0_6], %5 {strides = array<i32>} : memref<2x5xf32, #tpu.memory_space<vmem>>, vector<2x5xf32>,
    return
  }
}

</mosaic_0001>

<llo_original>
// kernel: linear_forward.1
$region0: #{linear_forward.1}
  #allocation0 [shape = 'u32[]', space=smem, size = 0x4, offset = 0x4, fixed_abs, tag = 'smem constant byte address 0x4 - core index']
  #allocation1 [shape = 'u32[144,128]{1,0:T(1,128)}', space=vmem, size = 0x12000, scoped, tag = 'internal scratch']
  %s0 = inlined_call_operand.vmem [shape: f32[2,10], index: 0, kind: input, shape index: {}]
  %s1 = inlined_call_operand.hbm [shape: f32[5,10], index: 1, kind: input, shape index: {}]
  %s2 = inlined_call_operand.vmem [shape: f32[1,5], index: 2, kind: input, shape index: {}]
  %s3 = inlined_call_operand.hbm [shape: f32[2,5], index: 3, kind: output, shape index: {}]
  %s4 = sld [smem:[#allocation0]]
  $region26: #{linear_forward.1} parent=0
    _
  %s6 = ssub.s32 1, %s4
  %s7 = scalar_select 0, %s6, %s4
  $region1: #{linear_forward.1} parent=0
    #allocation2 [shape = 'u8[4096]{0}', space=vmem, size = 0x1000, scoped, tag = 'input window, operand 1, single buffered']
    #allocation3 [shape = 's32[1]{0}', space=sflag, size = 0x4, scoped, tag = 'scoped memory for linear_forward.1']
    #allocation4 [shape = 's32[1]{0}', space=sflag, size = 0x4, scoped, tag = 'scoped memory for linear_forward.1']
    #allocation5 [shape = 'u8[1024]{0}', space=vmem, size = 0x400, scoped, tag = 'output window, operand 0, single buffered']
    %8 = vsyncpa [#allocation3], 0
    %9 = vsyncpa [#allocation4], 0
    // Predicated region
    $region2: #{linear_forward.1} parent=1 // pred_check
      _
    $region3: #{linear_forward.1} parent=1 // pred_check_branch
      %11 = sbr.rel (0) target = $region5
    $region4: #{linear_forward.1} parent=1 // pred_region
      _
    $region5: #{linear_forward.1} parent=1 // pred_fallthru
      _
    // Predicated region
    $region6: #{linear_forward.1} parent=1 // pred_check
      _
    $region7: #{linear_forward.1} parent=1 // pred_check_branch
      %13 = sbr.rel (0) target = $region9
    $region8: #{linear_forward.1} parent=1 // pred_region
      %s15 = ssub.s32 128, 128
      %16 = vsyncadd [#allocation3], %s15
      %s18 = sshll.u32 [#allocation2], 4
      %s19 = int_to_ptr.vmem [resolvable:$true] %s18
      %21 = dma.hbm_to_vmem [thread:$0]  %s1, 128, %s19, [#allocation3]
    $region9: #{linear_forward.1} parent=1 // pred_fallthru
      _
    // Predicated region
    $region10: #{linear_forward.1} parent=1 // pred_check
      _
    $region11: #{linear_forward.1} parent=1 // pred_check_branch
      %23 = sbr.rel (0) target = $region13
    $region12: #{linear_forward.1} parent=1 // pred_region
      _
    $region13: #{linear_forward.1} parent=1 // pred_fallthru
      _
    // Predicated region
    $region14: #{linear_forward.1} parent=1 // pred_check
      _
    $region15: #{linear_forward.1} parent=1 // pred_check_branch
      %25 = sbr.rel (0) target = $region17
    $region16: #{linear_forward.1} parent=1 // pred_region
      %26 = dma.done [#allocation3], 128
    $region17: #{linear_forward.1} parent=1 // pred_fallthru
      _
    %v27 = vld [vmem:[%s0] sm:$0x3]
    %v28 = vld [vmem:[#allocation2] sm:$0x1f]
    %v29 = vld [vmem:[%s2] sm:$0x1]
    %v31 = vlaneseq
    %v32 = vshrl.u32 %v31, 7
    %v33 = vsub.s32 0, %v32
    %v34 = vrot.slane %v29, %v33
    %vm36 = vcmask 80896
    %v38 = vsel %vm36, %v27, 0
    %v41 = vsel %vm36, %v28, 0
    %43 = vmatprep.subr.mxu0 0.0
    %44 = vmatpush1.xpose.msra.mxu0 %v41
    %45 = vmatprep.subr.mxu0 0.0
    %46 = vmatpush1.xpose.msra.mxu0 0.0
    %47 = vmatprep.subr.mxu0 0.0
    %48 = vmatpush1.xpose.msra.mxu0 0.0
    %49 = vmatprep.subr.mxu0 0.0
    %50 = vmatpush1.xpose.msra.mxu0 0.0
    %51 = vmatprep.subr.mxu0 0.0
    %52 = vmatpush1.xpose.msra.mxu0 0.0
    %53 = vmatprep.subr.mxu0 0.0
    %54 = vmatpush1.xpose.msra.mxu0 0.0
    %55 = vmatprep.subr.mxu0 0.0
    %56 = vmatpush1.xpose.msra.mxu0 0.0
    %57 = vmatprep.subr.mxu0 0.0
    %58 = vmatpush1.xpose.msra.mxu0 0.0
    %59 = vmatprep.subr.mxu0 0.0
    %60 = vmatpush1.xpose.msra.mxu0 0.0
    %61 = vmatprep.subr.mxu0 0.0
    %62 = vmatpush1.xpose.msra.mxu0 0.0
    %63 = vmatprep.subr.mxu0 0.0
    %64 = vmatpush1.xpose.msra.mxu0 0.0
    %65 = vmatprep.subr.mxu0 0.0
    %66 = vmatpush1.xpose.msra.mxu0 0.0
    %67 = vmatprep.subr.mxu0 0.0
    %68 = vmatpush1.xpose.msra.mxu0 0.0
    %69 = vmatprep.subr.mxu0 0.0
    %70 = vmatpush1.xpose.msra.mxu0 0.0
    %71 = vmatprep.subr.mxu0 0.0
    %72 = vmatpush1.xpose.msra.mxu0 0.0
    %73 = vmatprep.subr.mxu0 0.0
    %74 = vmatpush1.xpose.msra.mxu0 0.0
    %75 = vmatprep.subr.mxu0 0.0
    %76 = vmatpush1.xpose.msra.mxu0 0.0
    %77 = vmatprep.subr.mxu0 0.0
    %78 = vmatpush1.xpose.msra.mxu0 0.0
    %79 = vmatprep.subr.mxu0 0.0
    %80 = vmatpush1.xpose.msra.mxu0 0.0
    %81 = vmatprep.subr.mxu0 0.0
    %82 = vmatpush1.xpose.msra.mxu0 0.0
    %83 = vmatprep.subr.mxu0 0.0
    %84 = vmatpush1.xpose.msra.mxu0 0.0
    %85 = vmatprep.subr.mxu0 0.0
    %86 = vmatpush1.xpose.msra.mxu0 0.0
    %87 = vmatprep.subr.mxu0 0.0
    %88 = vmatpush1.xpose.msra.mxu0 0.0
    %89 = vmatprep.subr.mxu0 0.0
    %90 = vmatpush1.xpose.msra.mxu0 0.0
    %91 = vmatprep.subr.mxu0 0.0
    %92 = vmatpush1.xpose.msra.mxu0 0.0
    %93 = vmatprep.subr.mxu0 0.0
    %94 = vmatpush1.xpose.msra.mxu0 0.0
    %95 = vmatprep.subr.mxu0 0.0
    %96 = vmatpush1.xpose.msra.mxu0 0.0
    %97 = vmatprep.subr.mxu0 0.0
    %98 = vmatpush1.xpose.msra.mxu0 0.0
    %99 = vmatprep.subr.mxu0 0.0
    %100 = vmatpush1.xpose.msra.mxu0 0.0
    %101 = vmatprep.subr.mxu0 0.0
    %102 = vmatpush1.xpose.msra.mxu0 0.0
    %103 = vmatprep.subr.mxu0 0.0
    %104 = vmatpush1.xpose.msra.mxu0 0.0
    %105 = vmatprep.subr.mxu0 0.0
    %106 = vmatpush1.xpose.msra.mxu0 0.0
    %107 = vmatprep.mubr.f32.mxu0 0.0
    %108 = vmatmul.mubr.f32.gmra.mrb[0].mxu0 %v38
    %v109 = vpop.f32.mrb[0].mxu0
    %v110 = vadd.f32 %v34, %v109
    %v111 = vpop.f32.mrb[0].mxu0
    %112 = vdwg.mxu0
    %vm113 = vcmask 33792
    %114 = vst.msk [vmem:[#allocation5] sm:$0x3] %vm113, %v110
    // Predicated region
    $region18: #{linear_forward.1} parent=1 // pred_check
      _
    $region19: #{linear_forward.1} parent=1 // pred_check_branch
      %116 = sbr.rel (0) target = $region21
    $region20: #{linear_forward.1} parent=1 // pred_region
      %s118 = ssub.s32 32, 32
      %119 = vsyncadd [#allocation4], %s118
      %s121 = sshll.u32 [#allocation5], 4
      %s122 = int_to_ptr.vmem [resolvable:$true] %s121
      %124 = dma.vmem_to_hbm [thread:$0]  %s122, 32, %s3, [#allocation4]
    $region21: #{linear_forward.1} parent=1 // pred_fallthru
      _
    // Predicated region
    $region22: #{linear_forward.1} parent=1 // pred_check
      _
    $region23: #{linear_forward.1} parent=1 // pred_check_branch
      %126 = sbr.rel (0) target = $region25
    $region24: #{linear_forward.1} parent=1 // pred_region
      %127 = dma.done [#allocation4], 32
    $region25: #{linear_forward.1} parent=1 // pred_fallthru
      _
    %128 = vsyncpa [#allocation3], 1
    %129 = vsyncpa [#allocation4], 1

</llo_original>
